<compile_context>
chip_gen: v6e
topology: v6e:2x2x1
jax: 0.10.0
libtpu: 0.0.40
codegen_flags: <defaults>
</compile_context>

<pallas_src>
import functools

import numpy as np
import jax
import jax.numpy as jnp
from jax.experimental import pallas as pl
from jax.experimental.pallas import tpu as pltpu


# ----------------------------------------------------------------------------
# Stencil tables (exactly the coefficients built in WENO_Z.__init__)
# ----------------------------------------------------------------------------
_IS_STENCILS = np.array(
    [[1, -2, 1, 0, 0],
     [1, -4, 3, 0, 0],
     [0, 1, -2, 1, 0],
     [0, 1, 0, -1, 0],
     [0, 0, 1, -2, 1],
     [0, 0, 3, -4, 1]], dtype=np.float32)

_LP_STENCILS = np.array(
    [[2, -7, 11, 0, 0],
     [0, -1, 5, 2, 0],
     [0, 0, 2, 5, -1]], dtype=np.float32)

_D_COEFFS = (1.0 / 10.0, 6.0 / 10.0, 3.0 / 10.0)


# ----------------------------------------------------------------------------
# Pallas kernel: full WENO-Z pipeline on one (row_tile, lane_tile) block.
# Each row holds lane_tile output positions plus a 128-lane halo of the
# circularly padded signal, so the five shifted stencil operands are plain
# static lane slices of the loaded tile.
# ----------------------------------------------------------------------------
def _weno_z_kernel(x_ref, o_ref, *, is_c, lp_c, d_c, eps, w_pow, lt):
    xp = x_ref[...].astype(jnp.float32)               # (Rt, lt + 128)
    u = [xp[:, k:k + lt] for k in range(5)]           # 5 shifted operands (Rt, lt)

    def stencil(coeffs):
        # Accumulate sum_k coeffs[k] * u[k]; +/-1 coefficients become add/sub.
        acc = None
        for k, c in enumerate(coeffs):
            if c == 0.0:
                continue
            if acc is None:
                if c == 1.0:
                    acc = u[k]
                elif c == -1.0:
                    acc = -u[k]
                else:
                    acc = c * u[k]
            else:
                if c == 1.0:
                    acc = acc + u[k]
                elif c == -1.0:
                    acc = acc - u[k]
                else:
                    acc = acc + c * u[k]
        return acc

    # --- smoothness indicators IS_g = 13/12 * s0^2 + 1/4 * s1^2
    beta = []
    for g in range(3):
        s0 = stencil(is_c[2 * g])
        s1 = stencil(is_c[2 * g + 1])
        beta.append((13.0 / 12.0) * (s0 * s0) + 0.25 * (s1 * s1))

    # --- tau5 = | IS_2 - IS_0 |
    t5 = jnp.abs(beta[2] - beta[0])

    # --- fused un-normalized weights + interpolants: num = sum alpha_g * p_g,
    #     den = sum alpha_g ; the 1/6 interpolant scale is folded in at the end.
    num = None
    den = None
    for g in range(3):
        r = t5 * pl.reciprocal(beta[g] + eps, approx=True)
        if w_pow != 1:
            r = r ** w_pow
        alpha = d_c[g] * (1.0 + r)
        p = stencil(lp_c[g])
        num = alpha * p if num is None else num + alpha * p
        den = alpha if den is None else den + alpha

    out = num * (pl.reciprocal(den, approx=True) * (1.0 / 6.0))
    o_ref[...] = out.astype(o_ref.dtype)


# ----------------------------------------------------------------------------
# Wrapper: circular pad, halo'd row layout (sublane folding), pallas_call.
# ----------------------------------------------------------------------------
def weno_z_forward(x, *, flux_p=True, w_pow=1, eps=1e-13,
                   lane_tile_max=2048, row_tile_max=64):
    """x: (B, 1, L) -> (B, 1, L+1), matching the torch WENO_Z module."""
    B, C, L = x.shape
    assert C == 1, "WENO_Z operates on a single input channel"

    is_st = _IS_STENCILS
    lp_st = _LP_STENCILS
    pad = (3, 2)
    if not flux_p:
        is_st = is_st[:, ::-1].copy()
        lp_st = lp_st[:, ::-1].copy()
        pad = pad[::-1]
    l_out = L + 1

    def rup(a, m):
        return ((a + m - 1) // m) * m

    # Lane tile (multiple of 128) and number of lane tiles per batch row.
    lt = min(lane_tile_max, rup(l_out, 128))
    n_l = -(-l_out // lt)
    n_pad = (n_l + 1) * lt                              # room for last halo

    # Circular pad (single fused wrapper pass) + zero tail to n_pad lanes.
    x2 = x[:, 0, :]
    pieces = [x2[:, L - pad[0]:], x2, x2[:, :pad[1]]]
    tail = n_pad - (L + pad[0] + pad[1])
    if tail > 0:
        pieces.append(jnp.zeros((B, tail), dtype=x.dtype))
    xpad = jnp.concatenate(pieces, axis=-1)             # (B, n_pad)

    # Fold spatial tiles onto the sublane axis:
    # row (b*n_l + j) holds xpad[b, j*lt : j*lt + lt + 128]  (128-lane halo).
    a_part = xpad[:, :n_l * lt].reshape(B, n_l, lt)
    h_part = xpad[:, lt:(n_l + 1) * lt].reshape(B, n_l, lt)[:, :, :128]
    xrows = jnp.concatenate([a_part, h_part], axis=-1).reshape(B * n_l, lt + 128)

    rows = B * n_l
    rt = min(row_tile_max, rup(rows, 8))                # sublane tile (mult of 8)
    rows_pad = rup(rows, rt)
    if rows_pad > rows:
        xrows = jnp.concatenate(
            [xrows, jnp.zeros((rows_pad - rows, lt + 128), dtype=x.dtype)],
            axis=0)

    kernel = functools.partial(
        _weno_z_kernel,
        is_c=[[float(v) for v in row] for row in is_st],
        lp_c=[[float(v) for v in row] for row in lp_st],
        d_c=tuple(float(d) for d in _D_COEFFS),
        eps=float(eps), w_pow=int(w_pow), lt=lt)

    out_rows = pl.pallas_call(
        kernel,
        out_shape=jax.ShapeDtypeStruct((rows_pad, lt), x.dtype),
        grid=(rows_pad // rt,),
        in_specs=[pl.BlockSpec((rt, lt + 128), lambda i: (i, 0))],
        out_specs=pl.BlockSpec((rt, lt), lambda i: (i, 0)),
        compiler_params=pltpu.CompilerParams(
            dimension_semantics=("parallel",),
            vmem_limit_bytes=32 * 1024 * 1024),
    )(xrows)

    # Unfold rows back to (B, L+1) and restore the channel dim.
    out = out_rows[:rows].reshape(B, n_l * lt)[:, :l_out]
    return out[:, None, :]


# ----------------------------------------------------------------------------
# Plain-JAX reference (mirrors the torch op sequence) for validation
# ----------------------------------------------------------------------------
def weno_z_ref(x, *, flux_p=True, w_pow=1, eps=1e-13):
    B, C, L = x.shape
    is_st = _IS_STENCILS
    lp_st = _LP_STENCILS
    pad = (3, 2)
    if not flux_p:
        is_st = is_st[:, ::-1].copy()
        lp_st = lp_st[:, ::-1].copy()
        pad = pad[::-1]
    l_out = L + 1
    x2 = x[:, 0, :]
    xpad = jnp.concatenate([x2[:, L - pad[0]:], x2, x2[:, :pad[1]]], axis=-1)
    u = jnp.stack([xpad[:, k:k + l_out] for k in range(5)], axis=1)      # (B,5,Lo)
    s = jnp.einsum('ck,bkl->bcl', jnp.asarray(is_st), u)                 # (B,6,Lo)
    sq = s * s
    IS = 13.0 / 12.0 * sq[:, 0::2] + 0.25 * sq[:, 1::2]                  # (B,3,Lo)
    t5 = jnp.abs(IS[:, 2:3] - IS[:, 0:1])
    d = jnp.asarray(_D_COEFFS, dtype=x.dtype)[None, :, None]
    alpha = d * (1.0 + (t5 / (IS + eps)) ** w_pow)
    w = alpha / alpha.sum(axis=1, keepdims=True)
    P = jnp.einsum('ck,bkl->bcl', jnp.asarray(lp_st), u) * (1.0 / 6.0)
    return (w * P).sum(axis=1, keepdims=True)


if __name__ == "__main__":
    key = jax.random.PRNGKey(0)
    B, C, L = 2, 1, 16
    x = jax.random.normal(key, (B, C, L), dtype=jnp.float32)

    # Tolerances account for pl.reciprocal(approx=True) on the EUP.
    for flux_p in (True, False):
        out = jax.block_until_ready(weno_z_forward(x, flux_p=flux_p))
        ref = jax.block_until_ready(weno_z_ref(x, flux_p=flux_p))
        assert out.shape == (B, 1, L + 1), out.shape
        np.testing.assert_allclose(np.asarray(out), np.asarray(ref),
                                   rtol=5e-3, atol=5e-3)

    # Larger spatial size: exercises lane tiling (n_l > 1), halo rows and
    # sublane folding / row padding.
    B2, L2 = 2, 3000
    x2 = jax.random.normal(jax.random.PRNGKey(1), (B2, 1, L2), dtype=jnp.float32)
    out2 = jax.block_until_ready(weno_z_forward(x2))
    ref2 = jax.block_until_ready(weno_z_ref(x2))
    assert out2.shape == (B2, 1, L2 + 1), out2.shape
    np.testing.assert_allclose(np.asarray(out2), np.asarray(ref2),
                               rtol=5e-3, atol=5e-3)

    print("KERNEL_OK")
</pallas_src>

<mosaic_0001>
module attributes {stable_mosaic.version = 11 : i64} {
  func.func @_weno_z_kernel(%arg0: i32, %arg1: memref<8x256xf32, #tpu.memory_space<vmem>>, %arg2: memref<8x128xf32, #tpu.memory_space<vmem>>) attributes {dimension_semantics = [#tpu.dimension_semantics<parallel>], iteration_bounds = array<i64: 1>, scalar_prefetch = 0 : i64, scratch_operands = 0 : i64, tpu.core_type = #tpu.core_type<tc>, window_params = [{transform_indices = @transform_0, window_bounds = array<i64: 8, 256>}, {transform_indices = @transform_1, window_bounds = array<i64: 8, 128>}]} {
    %c0 = arith.constant 0 : index
    %c0_0 = arith.constant 0 : index
    %0 = vector.load %arg1[%c0, %c0_0] : memref<8x256xf32, #tpu.memory_space<vmem>>, vector<8x256xf32>
    %1 = vector.extract_strided_slice %0 {offsets = [0, 0], sizes = [8, 128], strides = [1, 1]} : vector<8x256xf32> to vector<8x128xf32>
    %2 = vector.extract_strided_slice %0 {offsets = [0, 1], sizes = [8, 128], strides = [1, 1]} : vector<8x256xf32> to vector<8x128xf32>
    %3 = vector.extract_strided_slice %0 {offsets = [0, 2], sizes = [8, 128], strides = [1, 1]} : vector<8x256xf32> to vector<8x128xf32>
    %4 = vector.extract_strided_slice %0 {offsets = [0, 3], sizes = [8, 128], strides = [1, 1]} : vector<8x256xf32> to vector<8x128xf32>
    %5 = vector.extract_strided_slice %0 {offsets = [0, 4], sizes = [8, 128], strides = [1, 1]} : vector<8x256xf32> to vector<8x128xf32>
    %cst = arith.constant -2.000000e+00 : f32
    %6 = vector.broadcast %cst : f32 to vector<8x128xf32>
    %7 = arith.mulf %6, %2 : vector<8x128xf32>
    %8 = arith.addf %1, %7 : vector<8x128xf32>
    %9 = arith.addf %8, %3 : vector<8x128xf32>
    %cst_1 = arith.constant -4.000000e+00 : f32
    %10 = vector.broadcast %cst_1 : f32 to vector<8x128xf32>
    %11 = arith.mulf %10, %2 : vector<8x128xf32>
    %12 = arith.addf %1, %11 : vector<8x128xf32>
    %cst_2 = arith.constant 3.000000e+00 : f32
    %13 = vector.broadcast %cst_2 : f32 to vector<8x128xf32>
    %14 = arith.mulf %13, %3 : vector<8x128xf32>
    %15 = arith.addf %12, %14 : vector<8x128xf32>
    %16 = arith.mulf %9, %9 : vector<8x128xf32>
    %cst_3 = arith.constant 1.08333337 : f32
    %17 = vector.broadcast %cst_3 : f32 to vector<8x128xf32>
    %18 = arith.mulf %17, %16 : vector<8x128xf32>
    %19 = arith.mulf %15, %15 : vector<8x128xf32>
    %cst_4 = arith.constant 2.500000e-01 : f32
    %20 = vector.broadcast %cst_4 : f32 to vector<8x128xf32>
    %21 = arith.mulf %20, %19 : vector<8x128xf32>
    %22 = arith.addf %18, %21 : vector<8x128xf32>
    %cst_5 = arith.constant -2.000000e+00 : f32
    %23 = vector.broadcast %cst_5 : f32 to vector<8x128xf32>
    %24 = arith.mulf %23, %3 : vector<8x128xf32>
    %25 = arith.addf %2, %24 : vector<8x128xf32>
    %26 = arith.addf %25, %4 : vector<8x128xf32>
    %27 = arith.subf %2, %4 : vector<8x128xf32>
    %28 = arith.mulf %26, %26 : vector<8x128xf32>
    %cst_6 = arith.constant 1.08333337 : f32
    %29 = vector.broadcast %cst_6 : f32 to vector<8x128xf32>
    %30 = arith.mulf %29, %28 : vector<8x128xf32>
    %31 = arith.mulf %27, %27 : vector<8x128xf32>
    %cst_7 = arith.constant 2.500000e-01 : f32
    %32 = vector.broadcast %cst_7 : f32 to vector<8x128xf32>
    %33 = arith.mulf %32, %31 : vector<8x128xf32>
    %34 = arith.addf %30, %33 : vector<8x128xf32>
    %cst_8 = arith.constant -2.000000e+00 : f32
    %35 = vector.broadcast %cst_8 : f32 to vector<8x128xf32>
    %36 = arith.mulf %35, %4 : vector<8x128xf32>
    %37 = arith.addf %3, %36 : vector<8x128xf32>
    %38 = arith.addf %37, %5 : vector<8x128xf32>
    %cst_9 = arith.constant 3.000000e+00 : f32
    %39 = vector.broadcast %cst_9 : f32 to vector<8x128xf32>
    %40 = arith.mulf %39, %3 : vector<8x128xf32>
    %cst_10 = arith.constant -4.000000e+00 : f32
    %41 = vector.broadcast %cst_10 : f32 to vector<8x128xf32>
    %42 = arith.mulf %41, %4 : vector<8x128xf32>
    %43 = arith.addf %40, %42 : vector<8x128xf32>
    %44 = arith.addf %43, %5 : vector<8x128xf32>
    %45 = arith.mulf %38, %38 : vector<8x128xf32>
    %cst_11 = arith.constant 1.08333337 : f32
    %46 = vector.broadcast %cst_11 : f32 to vector<8x128xf32>
    %47 = arith.mulf %46, %45 : vector<8x128xf32>
    %48 = arith.mulf %44, %44 : vector<8x128xf32>
    %cst_12 = arith.constant 2.500000e-01 : f32
    %49 = vector.broadcast %cst_12 : f32 to vector<8x128xf32>
    %50 = arith.mulf %49, %48 : vector<8x128xf32>
    %51 = arith.addf %47, %50 : vector<8x128xf32>
    %52 = arith.subf %51, %22 : vector<8x128xf32>
    %53 = math.absf %52 : vector<8x128xf32>
    %cst_13 = arith.constant 9.99999982E-14 : f32
    %54 = vector.broadcast %cst_13 : f32 to vector<8x128xf32>
    %55 = arith.addf %22, %54 : vector<8x128xf32>
    %56 = tpu.reciprocal %55 {approx = true} : vector<8x128xf32> -> vector<8x128xf32>
    %57 = arith.mulf %53, %56 : vector<8x128xf32>
    %cst_14 = arith.constant 1.000000e+00 : f32
    %58 = vector.broadcast %cst_14 : f32 to vector<8x128xf32>
    %59 = arith.addf %58, %57 : vector<8x128xf32>
    %cst_15 = arith.constant 1.000000e-01 : f32
    %60 = vector.broadcast %cst_15 : f32 to vector<8x128xf32>
    %61 = arith.mulf %60, %59 : vector<8x128xf32>
    %cst_16 = arith.constant 2.000000e+00 : f32
    %62 = vector.broadcast %cst_16 : f32 to vector<8x128xf32>
    %63 = arith.mulf %62, %1 : vector<8x128xf32>
    %cst_17 = arith.constant -7.000000e+00 : f32
    %64 = vector.broadcast %cst_17 : f32 to vector<8x128xf32>
    %65 = arith.mulf %64, %2 : vector<8x128xf32>
    %66 = arith.addf %63, %65 : vector<8x128xf32>
    %cst_18 = arith.constant 1.100000e+01 : f32
    %67 = vector.broadcast %cst_18 : f32 to vector<8x128xf32>
    %68 = arith.mulf %67, %3 : vector<8x128xf32>
    %69 = arith.addf %66, %68 : vector<8x128xf32>
    %70 = arith.mulf %61, %69 : vector<8x128xf32>
    %cst_19 = arith.constant 9.99999982E-14 : f32
    %71 = vector.broadcast %cst_19 : f32 to vector<8x128xf32>
    %72 = arith.addf %34, %71 : vector<8x128xf32>
    %73 = tpu.reciprocal %72 {approx = true} : vector<8x128xf32> -> vector<8x128xf32>
    %74 = arith.mulf %53, %73 : vector<8x128xf32>
    %cst_20 = arith.constant 1.000000e+00 : f32
    %75 = vector.broadcast %cst_20 : f32 to vector<8x128xf32>
    %76 = arith.addf %75, %74 : vector<8x128xf32>
    %cst_21 = arith.constant 6.000000e-01 : f32
    %77 = vector.broadcast %cst_21 : f32 to vector<8x128xf32>
    %78 = arith.mulf %77, %76 : vector<8x128xf32>
    %cst_22 = arith.constant 0.000000e+00 : f32
    %79 = vector.broadcast %cst_22 : f32 to vector<8x128xf32>
    %80 = arith.subf %79, %2 : vector<8x128xf32>
    %cst_23 = arith.constant 5.000000e+00 : f32
    %81 = vector.broadcast %cst_23 : f32 to vector<8x128xf32>
    %82 = arith.mulf %81, %3 : vector<8x128xf32>
    %83 = arith.addf %80, %82 : vector<8x128xf32>
    %cst_24 = arith.constant 2.000000e+00 : f32
    %84 = vector.broadcast %cst_24 : f32 to vector<8x128xf32>
    %85 = arith.mulf %84, %4 : vector<8x128xf32>
    %86 = arith.addf %83, %85 : vector<8x128xf32>
    %87 = arith.mulf %78, %86 : vector<8x128xf32>
    %88 = arith.addf %70, %87 : vector<8x128xf32>
    %89 = arith.addf %61, %78 : vector<8x128xf32>
    %cst_25 = arith.constant 9.99999982E-14 : f32
    %90 = vector.broadcast %cst_25 : f32 to vector<8x128xf32>
    %91 = arith.addf %51, %90 : vector<8x128xf32>
    %92 = tpu.reciprocal %91 {approx = true} : vector<8x128xf32> -> vector<8x128xf32>
    %93 = arith.mulf %53, %92 : vector<8x128xf32>
    %cst_26 = arith.constant 1.000000e+00 : f32
    %94 = vector.broadcast %cst_26 : f32 to vector<8x128xf32>
    %95 = arith.addf %94, %93 : vector<8x128xf32>
    %cst_27 = arith.constant 3.000000e-01 : f32
    %96 = vector.broadcast %cst_27 : f32 to vector<8x128xf32>
    %97 = arith.mulf %96, %95 : vector<8x128xf32>
    %cst_28 = arith.constant 2.000000e+00 : f32
    %98 = vector.broadcast %cst_28 : f32 to vector<8x128xf32>
    %99 = arith.mulf %98, %3 : vector<8x128xf32>
    %cst_29 = arith.constant 5.000000e+00 : f32
    %100 = vector.broadcast %cst_29 : f32 to vector<8x128xf32>
    %101 = arith.mulf %100, %4 : vector<8x128xf32>
    %102 = arith.addf %99, %101 : vector<8x128xf32>
    %103 = arith.subf %102, %5 : vector<8x128xf32>
    %104 = arith.mulf %97, %103 : vector<8x128xf32>
    %105 = arith.addf %88, %104 : vector<8x128xf32>
    %106 = arith.addf %89, %97 : vector<8x128xf32>
    %107 = tpu.reciprocal %106 {approx = true} : vector<8x128xf32> -> vector<8x128xf32>
    %cst_30 = arith.constant 0.166666672 : f32
    %108 = vector.broadcast %cst_30 : f32 to vector<8x128xf32>
    %109 = arith.mulf %107, %108 : vector<8x128xf32>
    %110 = arith.mulf %105, %109 : vector<8x128xf32>
    %c0_31 = arith.constant 0 : index
    %c0_32 = arith.constant 0 : index
    %111 = vector.load %arg2[%c0_31, %c0_32] : memref<8x128xf32, #tpu.memory_space<vmem>>, vector<8x128xf32>
    tpu.vector_store %arg2[%c0_31, %c0_32], %110 {strides = array<i32>} : memref<8x128xf32, #tpu.memory_space<vmem>>, vector<8x128xf32>,
    return
  }
  func.func @transform_0(%arg0: i32) -> (i32, i32) {
    %c0_i32 = arith.constant 0 : i32
    %c0_i32_0 = arith.constant 0 : i32
    return %arg0, %c0_i32 : i32, i32
  }
  func.func @transform_1(%arg0: i32) -> (i32, i32) {
    %c0_i32 = arith.constant 0 : i32
    %c0_i32_0 = arith.constant 0 : i32
    return %arg0, %c0_i32 : i32, i32
  }
}

</mosaic_0001>

<llo_original>
// kernel: tpu_custom_call.1
$region0: #{tpu_custom_call.1}
  #allocation0 [shape = 'u32[]', space=smem, size = 0x4, offset = 0x4, fixed_abs, tag = 'smem constant byte address 0x4 - core index']
  #allocation1 [shape = 'u32[144,128]{1,0:T(1,128)}', space=vmem, size = 0x12000, scoped, tag = 'internal scratch']
  %s0 = inlined_call_operand.hbm [shape: f32[8,256], index: 0, kind: input, shape index: {}]
  %s1 = inlined_call_operand.hbm [shape: f32[8,128], index: 1, kind: output, shape index: {}]
  %s2 = sld [smem:[#allocation0]]
  $region18: #{tpu_custom_call.1} parent=0
    _
  %s4 = ssub.s32 1, %s2
  %s5 = scalar_select 0, %s4, %s2
  $region1: #{tpu_custom_call.1} parent=0
    #allocation2 [shape = 'u8[8192]{0}', space=vmem, size = 0x2000, scoped, tag = 'input window, operand 0, single buffered']
    #allocation3 [shape = 's32[1]{0}', space=sflag, size = 0x4, scoped, tag = 'scoped memory for tpu_custom_call.1']
    #allocation4 [shape = 's32[1]{0}', space=sflag, size = 0x4, scoped, tag = 'scoped memory for tpu_custom_call.1']
    #allocation5 [shape = 'u8[4096]{0}', space=vmem, size = 0x1000, scoped, tag = 'output window, operand 0, single buffered']
    %6 = vsyncpa [#allocation3], 0
    %7 = vsyncpa [#allocation4], 0
    // Predicated region
    $region2: #{tpu_custom_call.1} parent=1 // pred_check
      _
    $region3: #{tpu_custom_call.1} parent=1 // pred_check_branch
      %9 = sbr.rel (0) target = $region5
    $region4: #{tpu_custom_call.1} parent=1 // pred_region
      %s11 = ssub.s32 256, 256
      %12 = vsyncadd [#allocation3], %s11
      %s14 = sshll.u32 [#allocation2], 4
      %s15 = int_to_ptr.vmem [resolvable:$true] %s14
      %17 = dma.hbm_to_vmem [thread:$0]  %s0, 256, %s15, [#allocation3]
    $region5: #{tpu_custom_call.1} parent=1 // pred_fallthru
      _
    // Predicated region
    $region6: #{tpu_custom_call.1} parent=1 // pred_check
      _
    $region7: #{tpu_custom_call.1} parent=1 // pred_check_branch
      %19 = sbr.rel (0) target = $region9
    $region8: #{tpu_custom_call.1} parent=1 // pred_region
      %20 = dma.done [#allocation3], 256
    $region9: #{tpu_custom_call.1} parent=1 // pred_fallthru
      _
    %v21 = vld [vmem:[#allocation2] sm:$0xff]
    %v22 = vld [vmem:[#allocation2 + $0x8] sm:$0xff]
    %v23 = vmul.f32 %v21, -2.0
    %v24 = vmul.f32 %v22, -2.0
    %27 = vrot.lane.b32.xlu0 %v23, 127
    %v28 = vpop.permute.xlu0 %27
    %29 = vrot.lane.b32.xlu0 %v24, 127
    %v30 = vpop.permute.xlu0 %29
    %vm31 = vcmask 1039360
    %v32 = vsel %vm31, %v28, %v30
    %v34 = vadd.f32 %v21, %v32
    %37 = vrot.lane.b32.xlu0 %v21, 126
    %v38 = vpop.permute.xlu0 %37
    %39 = vrot.lane.b32.xlu0 %v22, 126
    %v40 = vpop.permute.xlu0 %39
    %vm41 = vcmask 1031168
    %v42 = vsel %vm41, %v38, %v40
    %v44 = vadd.f32 %v34, %v42
    %v45 = vmul.f32 %v21, -4.0
    %v46 = vmul.f32 %v22, -4.0
    %49 = vrot.lane.b32.xlu0 %v45, 127
    %v50 = vpop.permute.xlu0 %49
    %51 = vrot.lane.b32.xlu0 %v46, 127
    %v52 = vpop.permute.xlu0 %51
    %v53 = vsel %vm31, %v50, %v52
    %v55 = vadd.f32 %v21, %v53
    %v56 = vmul.f32 %v21, 3.0
    %v57 = vmul.f32 %v22, 3.0
    %60 = vrot.lane.b32.xlu0 %v56, 126
    %v61 = vpop.permute.xlu0 %60
    %62 = vrot.lane.b32.xlu0 %v57, 126
    %v63 = vpop.permute.xlu0 %62
    %v64 = vsel %vm41, %v61, %v63
    %v66 = vadd.f32 %v55, %v64
    %v67 = vmul.f32 %v44, %v44
    %v68 = vmul.f32 %v67, 1.0833334
    %v69 = vmul.f32 %v66, %v66
    %v70 = vmul.f32 %v69, 0.25
    %v71 = vadd.f32 %v68, %v70
    %v73 = vadd.f32 %v22, %v30
    %v75 = vadd.f32 %v73, %v40
    %v76 = vsub.f32 %v21, %v42
    %v77 = vsub.f32 %v22, %v40
    %v78 = vmul.f32 %v75, %v75
    %v79 = vmul.f32 %v78, 1.0833334
    %v80 = vmul.f32 %v76, %v76
    %v81 = vmul.f32 %v77, %v77
    %v82 = vmul.f32 %v80, 0.25
    %v83 = vmul.f32 %v81, 0.25
    %v84 = vadd.f32 %v68, %v82
    %v85 = vadd.f32 %v79, %v83
    %v87 = vadd.f32 %v56, %v53
    %v88 = vadd.f32 %v57, %v52
    %v89 = vadd.f32 %v87, %v42
    %v90 = vadd.f32 %v88, %v40
    %v91 = vmul.f32 %v89, %v89
    %v92 = vmul.f32 %v90, %v90
    %v93 = vmul.f32 %v91, 0.25
    %v94 = vmul.f32 %v92, 0.25
    %v95 = vadd.f32 %v68, %v93
    %v96 = vadd.f32 %v79, %v94
    %98 = vrot.lane.b32.xlu0 %v71, 2
    %v99 = vpop.permute.xlu0 %98
    %v101 = vsub.f32 %v95, %v99
    %v102 = vsub.f32 %v96, %v99
    %v103 = vand.u32 2147483647, %v101
    %v104 = vand.u32 2147483647, %v102
    %v105 = vadd.f32 %v71, 1e-13
    %v106 = vrcp.pop %v105
    %108 = vrot.lane.b32.xlu0 %v106, 2
    %v109 = vpop.permute.xlu0 %108
    %v111 = vmul.f32 %v103, %v109
    %v112 = vmul.f32 %v104, %v109
    %v113 = vadd.f32 %v111, 1.0
    %v114 = vadd.f32 %v112, 1.0
    %v115 = vmul.f32 %v113, 0.1
    %v116 = vmul.f32 %v114, 0.1
    %v117 = vmul.f32 %v21, 2.0
    %v118 = vmul.f32 %v21, -7.0
    %v119 = vmul.f32 %v22, -7.0
    %122 = vrot.lane.b32.xlu0 %v118, 127
    %v123 = vpop.permute.xlu0 %122
    %124 = vrot.lane.b32.xlu0 %v119, 127
    %v125 = vpop.permute.xlu0 %124
    %v126 = vsel %vm31, %v123, %v125
    %v128 = vadd.f32 %v117, %v126
    %v129 = vmul.f32 %v21, 11.0
    %v130 = vmul.f32 %v22, 11.0
    %133 = vrot.lane.b32.xlu0 %v129, 126
    %v134 = vpop.permute.xlu0 %133
    %135 = vrot.lane.b32.xlu0 %v130, 126
    %v136 = vpop.permute.xlu0 %135
    %v137 = vsel %vm41, %v134, %v136
    %v139 = vadd.f32 %v128, %v137
    %141 = vrot.lane.b32.xlu0 %v139, 2
    %v142 = vpop.permute.xlu0 %141
    %v144 = vmul.f32 %v115, %v142
    %v145 = vmul.f32 %v116, %v142
    %v146 = vadd.f32 %v84, 1e-13
    %v147 = vadd.f32 %v85, 1e-13
    %v148 = vrcp.pop %v146
    %v149 = vrcp.pop %v147
    %152 = vrot.lane.b32.xlu0 %v148, 1
    %v153 = vpop.permute.xlu0 %152
    %154 = vrot.lane.b32.xlu0 %v149, 1
    %v155 = vpop.permute.xlu0 %154
    %vm156 = vcmask 7168
    %v157 = vsel %vm156, %v153, %v155
    %v160 = vmul.f32 %v103, %v153
    %v161 = vmul.f32 %v104, %v157
    %v162 = vadd.f32 %v160, 1.0
    %v163 = vadd.f32 %v161, 1.0
    %v164 = vmul.f32 %v162, 0.6
    %v165 = vmul.f32 %v163, 0.6
    %v166 = vsub.f32 0.0, %v21
    %v167 = vsub.f32 0.0, %v22
    %v168 = vmul.f32 %v21, 5.0
    %v169 = vmul.f32 %v22, 5.0
    %172 = vrot.lane.b32.xlu0 %v168, 127
    %v173 = vpop.permute.xlu0 %172
    %174 = vrot.lane.b32.xlu0 %v169, 127
    %v175 = vpop.permute.xlu0 %174
    %v176 = vsel %vm31, %v173, %v175
    %v179 = vadd.f32 %v166, %v176
    %v180 = vadd.f32 %v167, %v175
    %v181 = vmul.f32 %v22, 2.0
    %184 = vrot.lane.b32.xlu0 %v117, 126
    %v185 = vpop.permute.xlu0 %184
    %186 = vrot.lane.b32.xlu0 %v181, 126
    %v187 = vpop.permute.xlu0 %186
    %v188 = vsel %vm41, %v185, %v187
    %v191 = vadd.f32 %v179, %v188
    %v192 = vadd.f32 %v180, %v187
    %195 = vrot.lane.b32.xlu0 %v191, 1
    %v196 = vpop.permute.xlu0 %195
    %197 = vrot.lane.b32.xlu0 %v192, 1
    %v198 = vpop.permute.xlu0 %197
    %v199 = vsel %vm156, %v196, %v198
    %v202 = vmul.f32 %v164, %v196
    %v203 = vmul.f32 %v165, %v199
    %v204 = vadd.f32 %v144, %v202
    %v205 = vadd.f32 %v145, %v203
    %v206 = vadd.f32 %v115, %v164
    %v207 = vadd.f32 %v116, %v165
    %v208 = vadd.f32 %v95, 1e-13
    %v209 = vadd.f32 %v96, 1e-13
    %v210 = vrcp.pop %v208
    %v211 = vrcp.pop %v209
    %v212 = vmul.f32 %v103, %v210
    %v213 = vmul.f32 %v104, %v211
    %v214 = vadd.f32 %v212, 1.0
    %v215 = vadd.f32 %v213, 1.0
    %v216 = vmul.f32 %v214, 0.3
    %v217 = vmul.f32 %v215, 0.3
    %v218 = vadd.f32 %v117, %v176
    %v219 = vadd.f32 %v181, %v175
    %v220 = vsub.f32 %v218, %v42
    %v221 = vsub.f32 %v219, %v40
    %v222 = vmul.f32 %v216, %v220
    %v223 = vmul.f32 %v217, %v221
    %v224 = vadd.f32 %v204, %v222
    %v225 = vadd.f32 %v205, %v223
    %v226 = vadd.f32 %v206, %v216
    %v227 = vadd.f32 %v207, %v217
    %v228 = vrcp.pop %v226
    %v229 = vrcp.pop %v227
    %v230 = vmul.f32 %v228, 0.16666667
    %v231 = vmul.f32 %v229, 0.16666667
    %v232 = vmul.f32 %v224, %v230
    %v233 = vmul.f32 %v225, %v231
    %236 = vrot.lane.b32.xlu0 %v232, 126
    %v237 = vpop.permute.xlu0 %236
    %238 = vrot.lane.b32.xlu0 %v233, 126
    %v239 = vpop.permute.xlu0 %238
    %v240 = vsel %vm41, %v237, %v239
    %242 = vst [vmem:[#allocation5] sm:$0xff] %v240
    // Predicated region
    $region10: #{tpu_custom_call.1} parent=1 // pred_check
      _
    $region11: #{tpu_custom_call.1} parent=1 // pred_check_branch
      %244 = sbr.rel (0) target = $region13
    $region12: #{tpu_custom_call.1} parent=1 // pred_region
      %s246 = ssub.s32 128, 128
      %247 = vsyncadd [#allocation4], %s246
      %s249 = sshll.u32 [#allocation5], 4
      %s250 = int_to_ptr.vmem [resolvable:$true] %s249
      %252 = dma.vmem_to_hbm [thread:$0]  %s250, 128, %s1, [#allocation4]
    $region13: #{tpu_custom_call.1} parent=1 // pred_fallthru
      _
    // Predicated region
    $region14: #{tpu_custom_call.1} parent=1 // pred_check
      _
    $region15: #{tpu_custom_call.1} parent=1 // pred_check_branch
      %254 = sbr.rel (0) target = $region17
    $region16: #{tpu_custom_call.1} parent=1 // pred_region
      %255 = dma.done [#allocation4], 128
    $region17: #{tpu_custom_call.1} parent=1 // pred_fallthru
      _
    %256 = vsyncpa [#allocation3], 1
    %257 = vsyncpa [#allocation4], 1

</llo_original>
